<compile_context>
chip_gen: v5e
topology: v5e:2x2
jax: 0.10.0
libtpu: 0.0.40
codegen_flags: <defaults>
</compile_context>

<pallas_src>
import math

import jax
import jax.numpy as jnp
from jax.experimental import pallas as pl
from jax.experimental.pallas import tpu as pltpu


def _round_up(x, m):
    return ((x + m - 1) // m) * m


# --------------------------------------------------------------------------
# Phase 1: H = X @ W   (feature transform, computed exactly once per row)
# --------------------------------------------------------------------------
def feat_kernel(x_ref, w_ref, h_ref):
    # TODO(synk): dropout omitted (inference / p=0 path); training-mode dropout
    # would use pltpu.prng_seed + pltpu.prng_random_bits on x_ref here.
    h_ref[...] = jnp.dot(
        x_ref[...], w_ref[...], preferred_element_type=jnp.float32
    ).astype(h_ref.dtype)


# --------------------------------------------------------------------------
# Phase 2: out = ReLU(A_hat @ H + bias)   (neighbor aggregation)
# --------------------------------------------------------------------------
def agg_kernel(a_ref, h_ref, b_ref, o_ref, acc_ref):
    k = pl.program_id(1)

    @pl.when(k == 0)
    def _init():
        acc_ref[...] = jnp.zeros_like(acc_ref)

    # bf16 normalized-adjacency tile @ bf16 features, f32 accumulate (MXU).
    acc_ref[...] += jnp.dot(a_ref[...], h_ref[...],
                            preferred_element_type=jnp.float32)

    @pl.when(k == pl.num_programs(1) - 1)
    def _finalize():
        h = acc_ref[...] + b_ref[...]                          # bias, once
        o_ref[...] = jnp.maximum(h, 0.0).astype(o_ref.dtype)   # ReLU


def gcl_forward(x, w, adj, norm, bias, *, block_m=256, block_k=512):
    """ReLU((diag(norm) A diag(norm)) @ (x @ w) + bias)  ==  GCL.forward (eval)."""
    N, Fin = x.shape
    Fout = w.shape[1]

    # --- tile sizes & padded shapes ----------------------------------------
    tm = min(block_m, _round_up(N, 128))     # row tile
    tk = min(block_k, _round_up(N, 128))     # neighbor-reduction tile
    Np = _round_up(N, math.lcm(tm, tk))
    Fin_p = _round_up(Fin, 128)
    Fp = _round_up(Fout, 128)                # lane-dense output / full MXU cols

    # --- fold both norms into the adjacency; quantize adjacency to bf16 -----
    norm = norm.reshape(N, 1).astype(jnp.float32)
    a_hat = (norm * adj.astype(jnp.float32) * norm.reshape(1, N)).astype(jnp.bfloat16)

    x_p = jnp.zeros((Np, Fin_p), jnp.float32).at[:N, :Fin].set(x)
    a_p = jnp.zeros((Np, Np), jnp.bfloat16).at[:N, :N].set(a_hat)
    w_p = jnp.zeros((Fin_p, Fp), jnp.float32).at[:Fin, :Fout].set(w)
    b_p = jnp.zeros((1, Fp), jnp.float32).at[0, :Fout].set(bias.reshape(-1))

    # --- phase 1: H = X @ W  (bf16 output for the aggregation matmul) -------
    vmem1 = 2 * tm * Fin_p * 4 + Fin_p * Fp * 4 + 2 * tm * Fp * 2
    h_p = pl.pallas_call(
        feat_kernel,
        out_shape=jax.ShapeDtypeStruct((Np, Fp), jnp.bfloat16),
        grid_spec=pltpu.PrefetchScalarGridSpec(
            num_scalar_prefetch=0,
            grid=(Np // tm,),
            in_specs=[
                pl.BlockSpec((tm, Fin_p), lambda i: (i, 0)),     # X row tile
                pl.BlockSpec((Fin_p, Fp), lambda i: (0, 0)),     # W (resident)
            ],
            out_specs=pl.BlockSpec((tm, Fp), lambda i: (i, 0)),
        ),
        compiler_params=pltpu.CompilerParams(
            dimension_semantics=("parallel",),
            vmem_limit_bytes=min(max(2 * vmem1 + (8 << 20), 32 << 20), 100 << 20),
        ),
    )(x_p, w_p)

    # --- phase 2: out = ReLU(A_hat @ H + b) ---------------------------------
    vmem2 = (2 * tm * tk * 2        # A_hat tiles (bf16, double-buffered)
             + 2 * tk * Fp * 2      # H k-slices (bf16)
             + 2 * tm * Fp * 4      # output tiles
             + Fp * 4               # bias
             + tm * Fp * 4)         # accumulator scratch
    out = pl.pallas_call(
        agg_kernel,
        out_shape=jax.ShapeDtypeStruct((Np, Fp), jnp.float32),
        grid_spec=pltpu.PrefetchScalarGridSpec(
            num_scalar_prefetch=0,
            grid=(Np // tm, Np // tk),
            in_specs=[
                pl.BlockSpec((tm, tk), lambda i, k: (i, k)),     # A_hat tile
                pl.BlockSpec((tk, Fp), lambda i, k: (k, 0)),     # H k-slice
                pl.BlockSpec((1, Fp), lambda i, k: (0, 0)),      # bias (resident)
            ],
            out_specs=pl.BlockSpec((tm, Fp), lambda i, k: (i, 0)),
            scratch_shapes=[pltpu.VMEM((tm, Fp), jnp.float32)],
        ),
        compiler_params=pltpu.CompilerParams(
            dimension_semantics=("parallel", "arbitrary"),
            vmem_limit_bytes=min(max(2 * vmem2 + (8 << 20), 32 << 20), 100 << 20),
        ),
    )(a_p, h_p, b_p)

    return out[:N, :Fout]


if __name__ == "__main__":
    key = jax.random.PRNGKey(0)
    k_x, k_w, k_b, k_a = jax.random.split(key, 4)

    N, Fin, Fout = 256, 8, 32

    # Node features
    x = jax.random.normal(k_x, (N, Fin), dtype=jnp.float32)

    # Parameters: uniform(-stdv, stdv), stdv = 1/sqrt(out_feats)  (reset_parameters)
    stdv = 1.0 / math.sqrt(Fout)
    w = jax.random.uniform(k_w, (Fin, Fout), minval=-stdv, maxval=stdv, dtype=jnp.float32)
    bias = jax.random.uniform(k_b, (Fout,), minval=-stdv, maxval=stdv, dtype=jnp.float32)

    # Deterministic small graph: random symmetric adjacency with self-loops.
    a_rand = jax.random.uniform(k_a, (N, N)) < 0.05
    adj = jnp.logical_or(a_rand, a_rand.T)
    adj = jnp.logical_or(adj, jnp.eye(N, dtype=bool)).astype(jnp.float32)

    # norm = deg^{-1/2} over in-edges (DGL GCN convention), shape (N, 1)
    deg = jnp.sum(adj, axis=1, keepdims=True)
    norm = 1.0 / jnp.sqrt(deg)

    # Small tiles -> 2x2 aggregation grid: exercises init / accumulate /
    # finalize and the parallel row axis.
    out = gcl_forward(x, w, adj, norm, bias, block_m=128, block_k=128)
    jax.block_until_ready(out)

    # f32 reference of the original module semantics
    h_ref = x @ w
    h_ref = h_ref * norm
    h_ref = adj @ h_ref
    h_ref = h_ref * norm
    h_ref = h_ref + bias
    h_ref = jnp.maximum(h_ref, 0.0)

    assert out.shape == (N, Fout)
    # bf16 streaming of the normalized adjacency / transformed features in the
    # aggregation matmul => ~1e-3 abs error vs. the pure-f32 reference.
    assert jnp.allclose(out, h_ref, atol=2e-2, rtol=2e-2), \
        float(jnp.max(jnp.abs(out - h_ref)))

    # Second config: N not a multiple of the tile size (exercises padding) and
    # default tile sizes (single reduction step).
    N2 = 100
    x2 = x[:N2]
    adj2 = adj[:N2, :N2]
    deg2 = jnp.sum(adj2, axis=1, keepdims=True)
    norm2 = 1.0 / jnp.sqrt(deg2)
    out2 = gcl_forward(x2, w, adj2, norm2, bias)
    jax.block_until_ready(out2)

    h2_ref = jnp.maximum((adj2 @ ((x2 @ w) * norm2)) * norm2 + bias, 0.0)
    assert out2.shape == (N2, Fout)
    assert jnp.allclose(out2, h2_ref, atol=2e-2, rtol=2e-2), \
        float(jnp.max(jnp.abs(out2 - h2_ref)))

    print("KERNEL_OK")
</pallas_src>

<mosaic_0001>
module attributes {stable_mosaic.version = 11 : i64} {
  func.func @feat_kernel(%arg0: i32, %arg1: memref<128x128xf32, #tpu.memory_space<vmem>>, %arg2: memref<128x128xf32, #tpu.memory_space<vmem>>, %arg3: memref<128x128xbf16, #tpu.memory_space<vmem>>) attributes {dimension_semantics = [#tpu.dimension_semantics<parallel>], iteration_bounds = array<i64: 2>, scalar_prefetch = 0 : i64, scratch_operands = 0 : i64, tpu.core_type = #tpu.core_type<tc>, window_params = [{transform_indices = @transform_0, window_bounds = array<i64: 128, 128>}, {pipeline_mode = #tpu.pipeline_mode<synchronous>, transform_indices = @transform_1, window_bounds = array<i64: 128, 128>}, {transform_indices = @transform_2, window_bounds = array<i64: 128, 128>}]} {
    %c0 = arith.constant 0 : index
    %c0_0 = arith.constant 0 : index
    %0 = vector.load %arg1[%c0, %c0_0] : memref<128x128xf32, #tpu.memory_space<vmem>>, vector<128x128xf32>
    %c0_1 = arith.constant 0 : index
    %c0_2 = arith.constant 0 : index
    %1 = vector.load %arg2[%c0_1, %c0_2] : memref<128x128xf32, #tpu.memory_space<vmem>>, vector<128x128xf32>
    %cst = arith.constant dense<0.000000e+00> : vector<128x128xf32>
    %2 = tpu.matmul %0, %1, %cst {dimension_numbers = #tpu.dot_dimension_numbers<[1], [0], [0], [1], [0, 0, 1, 1], [], []>} : vector<128x128xf32>, vector<128x128xf32>, vector<128x128xf32> -> vector<128x128xf32>
    %3 = arith.truncf %2 : vector<128x128xf32> to vector<128x128xbf16>
    %c0_3 = arith.constant 0 : index
    %c0_4 = arith.constant 0 : index
    %4 = vector.load %arg3[%c0_3, %c0_4] : memref<128x128xbf16, #tpu.memory_space<vmem>>, vector<128x128xbf16>
    tpu.vector_store %arg3[%c0_3, %c0_4], %3 {strides = array<i32>} : memref<128x128xbf16, #tpu.memory_space<vmem>>, vector<128x128xbf16>,
    return
  }
  func.func @transform_0(%arg0: i32) -> (i32, i32) {
    %c0_i32 = arith.constant 0 : i32
    %c0_i32_0 = arith.constant 0 : i32
    return %arg0, %c0_i32 : i32, i32
  }
  func.func @transform_1(%arg0: i32) -> (i32, i32) {
    %c0_i32 = arith.constant 0 : i32
    %c0_i32_0 = arith.constant 0 : i32
    %c0_i32_1 = arith.constant 0 : i32
    return %c0_i32, %c0_i32_0 : i32, i32
  }
  func.func @transform_2(%arg0: i32) -> (i32, i32) {
    %c0_i32 = arith.constant 0 : i32
    %c0_i32_0 = arith.constant 0 : i32
    return %arg0, %c0_i32 : i32, i32
  }
}

</mosaic_0001>

<llo_original>
// kernel: tpu_custom_call.1
$region0: #{tpu_custom_call.1}
  #allocation0 [shape = 'u32[]', space=smem, size = 0x4, offset = 0x4, fixed_abs, tag = 'smem constant byte address 0x4 - core index']
  #allocation1 [shape = 'u32[72,128]{1,0:T(1,128)}', space=vmem, size = 0x9000, scoped, tag = 'internal scratch']
  %s0 = inlined_call_operand.hbm [shape: f32[256,128], index: 0, kind: input, shape index: {}]
  %s1 = inlined_call_operand.hbm [shape: f32[128,128], index: 1, kind: input, shape index: {}]
  %s2 = inlined_call_operand.hbm [shape: bf16[256,128], index: 2, kind: output, shape index: {}]
  %s3 = sld [smem:[#allocation0]]
  $region49: #{tpu_custom_call.1} parent=0
    _
  %s5 = ssub.s32 1, %s3
  %s6 = scalar_select 0, %s5, %s3
  $region1: #{tpu_custom_call.1} parent=0
    #allocation2 [shape = 'u8[131072]{0}', space=vmem, size = 0x20000, scoped, tag = 'input window, operand 0']
    #allocation3 [shape = 's32[2]{0}', space=sflag, size = 0x8, scoped, tag = 'scoped memory for tpu_custom_call.1']
    #allocation4 [shape = 's32[2]{0}', space=sflag, size = 0x8, scoped, tag = 'scoped memory for tpu_custom_call.1']
    #allocation5 [shape = 'u8[65536]{0}', space=vmem, size = 0x10000, scoped, tag = 'input window, operand 1, single buffered']
    #allocation6 [shape = 's32[1]{0}', space=sflag, size = 0x4, scoped, tag = 'scoped memory for tpu_custom_call.1']
    #allocation7 [shape = 'u8[65536]{0}', space=vmem, size = 0x10000, scoped, tag = 'output window, operand 0']
    %7 = vsyncpa [#allocation3], 0
    %s8 = scalar_lea.sflag [#allocation3], 1
    %9 = vsyncpa %s8, 0
    %10 = vsyncpa [#allocation6], 0
    %11 = vsyncpa [#allocation4], 0
    %s12 = scalar_lea.sflag [#allocation4], 1
    %13 = vsyncpa %s12, 0
    loop: start=0, step=1, limit=4
    $region2: #{tpu_custom_call.1} parent=1 // loop_pre_header
      _
    $region3: #{tpu_custom_call.1} parent=1 // loop_header
      %s15 = sphi 0, %s19
      %p16 = scmp.ge.s32.totalorder %s15, 4
      %s25 = sphi 0, %s27
      %s28 = sphi 0, %s25
      %s29 = sphi 0, %s28
      %s45 = sphi 0, %s29
      %s49 = sphi 0, %s49
      %s51 = sphi 0, %s49
      %s52 = sphi 0, %s51
      %s66 = sphi 0, %s52
      %s72 = sphi 0, %s74
      %s75 = sphi 0, %s72
      %s76 = sphi 0, %s75
      %s92 = sphi 0, %s76
    $region4: #{tpu_custom_call.1} parent=1 // loop_header_branch
      %18 = sbr.rel (%p16) target = $region8
    $region5: #{tpu_custom_call.1} parent=1 // loop_body
      %s20 = ssub.s32 %s15, 1
      %s21 = ssub.s32 %s15, 2
      %s22 = sadd.s32 %s15, 1
      %s23 = ssub.s32 %s15, %s22
      %p24 = scmp.eq.s32.totalorder %s23, 0
      %s26 = sadd.s32 %s25, 1
      %s27 = scalar_select %p24, %s25, %s26
      %p30 = pneg %p24
      %p31 = scmp.eq.s32.totalorder %s15, 1
      %p32 = por %p30, %p31
      %p33 = scmp.ne.s32.totalorder %s25, %s28
      %p34 = scmp.eq.s32.totalorder %s15, 0
      %p35 = por %p33, %p34
      %p36 = scmp.ne.s32.totalorder %s25, %s28
      %p37 = scmp.eq.s32.totalorder %s20, 1
      %p38 = por %p36, %p37
      %p39 = scmp.ne.s32.totalorder %s28, %s29
      %p40 = scmp.eq.s32.totalorder %s20, 0
      %p41 = por %p39, %p40
      %p42 = scmp.ne.s32.totalorder %s28, %s29
      %p43 = scmp.eq.s32.totalorder %s21, 1
      %p44 = por %p42, %p43
      %p46 = scmp.ne.s32.totalorder %s29, %s45
      %p47 = scmp.eq.s32.totalorder %s21, 0
      %p48 = por %p46, %p47
      %s50 = sadd.s32 %s49, 1
      %p53 = scmp.eq.s32.totalorder %s15, 1
      %p54 = scmp.ne.s32.totalorder %s49, %s51
      %p55 = scmp.eq.s32.totalorder %s15, 0
      %p56 = por %p54, %p55
      %p57 = scmp.ne.s32.totalorder %s49, %s51
      %p58 = scmp.eq.s32.totalorder %s20, 1
      %p59 = por %p57, %p58
      %p60 = scmp.ne.s32.totalorder %s51, %s52
      %p61 = scmp.eq.s32.totalorder %s20, 0
      %p62 = por %p60, %p61
      %p63 = scmp.ne.s32.totalorder %s51, %s52
      %p64 = scmp.eq.s32.totalorder %s21, 1
      %p65 = por %p63, %p64
      %p67 = scmp.ne.s32.totalorder %s52, %s66
      %p68 = scmp.eq.s32.totalorder %s21, 0
      %p69 = por %p67, %p68
      %s70 = ssub.s32 %s15, %s22
      %p71 = scmp.eq.s32.totalorder %s70, 0
      %s73 = sadd.s32 %s72, 1
      %s74 = scalar_select %p71, %s72, %s73
      %p77 = pneg %p71
      %p78 = scmp.eq.s32.totalorder %s15, 1
      %p79 = por %p77, %p78
      %p80 = scmp.ne.s32.totalorder %s72, %s75
      %p81 = scmp.eq.s32.totalorder %s15, 0
      %p82 = por %p80, %p81
      %p83 = scmp.ne.s32.totalorder %s72, %s75
      %p84 = scmp.eq.s32.totalorder %s20, 1
      %p85 = por %p83, %p84
      %p86 = scmp.ne.s32.totalorder %s75, %s76
      %p87 = scmp.eq.s32.totalorder %s20, 0
      %p88 = por %p86, %p87
      %p89 = scmp.ne.s32.totalorder %s75, %s76
      %p90 = scmp.eq.s32.totalorder %s21, 1
      %p91 = por %p89, %p90
      %p93 = scmp.ne.s32.totalorder %s76, %s92
      %p94 = scmp.eq.s32.totalorder %s21, 0
      %p95 = por %p93, %p94
      %p96 = scmp.le.s32.totalorder 1, %s15
      %p97 = scmp.lt.s32.totalorder %s15, 3
      %p98 = pnand %p96, %p97
      %p99 = pneg %p98
      // Predicated region
      $region9: #{tpu_custom_call.1} parent=5 // pred_check
        _
      $region10: #{tpu_custom_call.1} parent=5 // pred_check_branch
        %101 = sbr.rel (%p98) target = $region12
      $region11: #{tpu_custom_call.1} parent=5 // pred_region
        %s102 = ssub.s32 %s15, 1
        // Predicated region
        $region13: #{tpu_custom_call.1} parent=11 // pred_check
          %p103 = pneg %p62
        $region14: #{tpu_custom_call.1} parent=11 // pred_check_branch
          %105 = sbr.rel (%p103) target = $region16
        $region15: #{tpu_custom_call.1} parent=11 // pred_region
          %107 = vsyncadd [#allocation6], 0
          %s108 = sshll.u32 %s1, 4
          %s109 = int_to_ptr.hbm [resolvable:$true] %s108
          %s110 = sshll.u32 [#allocation5], 4
          %s111 = int_to_ptr.vmem [resolvable:$true] %s110
          %116 = dma.hbm_to_vmem [thread:$0]  %s109, 2048, %s111, [#allocation6], 128, 128, 8
        $region16: #{tpu_custom_call.1} parent=11 // pred_fallthru
          _
      $region12: #{tpu_custom_call.1} parent=5 // pred_fallthru
        _
      %p117 = scmp.lt.s32.totalorder %s15, 2
      // Predicated region
      $region17: #{tpu_custom_call.1} parent=5 // pred_check
        %p118 = pneg %p117
      $region18: #{tpu_custom_call.1} parent=5 // pred_check_branch
        %120 = sbr.rel (%p118) target = $region20
      $region19: #{tpu_custom_call.1} parent=5 // pred_region
        // Predicated region
        $region21: #{tpu_custom_call.1} parent=19 // pred_check
          %p121 = pneg %p35
        $region22: #{tpu_custom_call.1} parent=19 // pred_check_branch
          %123 = sbr.rel (%p121) target = $region24
        $region23: #{tpu_custom_call.1} parent=19 // pred_region
          %s124 = sand.u32 %s25, 1
          %s125 = scalar_lea.sflag [#allocation3], %s124
          %s126 = sand.u32 %s25, 1
          %s127 = smul.addr %s126, 128
          %s128 = scalar_lea.vmem [#allocation2], %s127
          %s129 = smul.u32 16, %s15
          %131 = vsyncadd %s125, 0
          %s132 = smul.addr %s129, 8
          %s133 = scalar_lea.hbm %s0, %s132
          %s134 = sshll.u32 %s133, 4
          %s135 = int_to_ptr.hbm [resolvable:$true] %s134
          %s136 = sshll.u32 %s128, 4
          %s137 = int_to_ptr.vmem [resolvable:$true] %s136
          %142 = dma.hbm_to_vmem [thread:$0]  %s135, 2048, %s137, %s125, 128, 128, 8
        $region24: #{tpu_custom_call.1} parent=19 // pred_fallthru
          _
      $region20: #{tpu_custom_call.1} parent=5 // pred_fallthru
        _
      %p143 = scmp.le.s32.totalorder 1, %s15
      %p144 = scmp.lt.s32.totalorder %s15, 3
      %p145 = pnand %p143, %p144
      %p146 = pneg %p145
      // Predicated region
      $region25: #{tpu_custom_call.1} parent=5 // pred_check
        _
      $region26: #{tpu_custom_call.1} parent=5 // pred_check_branch
        %148 = sbr.rel (%p145) target = $region28
      $region27: #{tpu_custom_call.1} parent=5 // pred_region
        %s149 = ssub.s32 %s15, 1
        %s150 = sand.u32 %s28, 1
        %s151 = scalar_lea.sflag [#allocation3], %s150
        %s152 = sand.u32 %s28, 1
        %s153 = smul.addr %s152, 128
        %s154 = scalar_lea.vmem [#allocation2], %s153
        // Predicated region
        $region29: #{tpu_custom_call.1} parent=27 // pred_check
          %p155 = pneg %p41
        $region30: #{tpu_custom_call.1} parent=27 // pred_check_branch
          %157 = sbr.rel (%p155) target = $region32
        $region31: #{tpu_custom_call.1} parent=27 // pred_region
          %159 = dma.done %s151, 2048
        $region32: #{tpu_custom_call.1} parent=27 // pred_fallthru
          _
        // Predicated region
        $region33: #{tpu_custom_call.1} parent=27 // pred_check
          %p160 = pneg %p62
        $region34: #{tpu_custom_call.1} parent=27 // pred_check_branch
          %162 = sbr.rel (%p160) target = $region36
        $region35: #{tpu_custom_call.1} parent=27 // pred_region
          %164 = dma.done [#allocation6], 2048
        $region36: #{tpu_custom_call.1} parent=27 // pred_fallthru
          _
        %s165 = sand.u32 %s28, 1
        %s166 = scalar_lea.sflag [#allocation3], %s165
        %s167 = sand.u32 %s28, 1
        %s168 = smul.addr %s167, 128
        %s169 = scalar_lea.vmem [#allocation2], %s168
        %p170 = pneg %p41
        %p171 = pneg %p38
        %p172 = pneg %p62
        %p173 = pneg %p59
        %p174 = pneg %p88
        %p175 = pneg %p85
        %s176 = sand.u32 %s75, 1
        %s177 = scalar_lea.sflag [#allocation4], %s176
        %s178 = sand.u32 %s75, 1
        %s179 = smul.addr %s178, 64
        %s180 = scalar_lea.vmem [#allocation7], %s179
        %s181 = smul.u32 16, %s20
        %s182 = smul.u32 16, %s20
        %v183 = vld [vmem:[%s154] sm:$0xff]
        %v184 = vld [vmem:[%s154 + $0x8] sm:$0xff]
        %v185 = vld [vmem:[%s154 + $0x10] sm:$0xff]
        %v186 = vld [vmem:[%s154 + $0x18] sm:$0xff]
        %v187 = vld [vmem:[%s154 + $0x20] sm:$0xff]
        %v188 = vld [vmem:[%s154 + $0x28] sm:$0xff]
        %v189 = vld [vmem:[%s154 + $0x30] sm:$0xff]
        %v190 = vld [vmem:[%s154 + $0x38] sm:$0xff]
        %v191 = vld [vmem:[%s154 + $0x40] sm:$0xff]
        %v192 = vld [vmem:[%s154 + $0x48] sm:$0xff]
        %v193 = vld [vmem:[%s154 + $0x50] sm:$0xff]
        %v194 = vld [vmem:[%s154 + $0x58] sm:$0xff]
        %v195 = vld [vmem:[%s154 + $0x60] sm:$0xff]
        %v196 = vld [vmem:[%s154 + $0x68] sm:$0xff]
        %v197 = vld [vmem:[%s154 + $0x70] sm:$0xff]
        %v198 = vld [vmem:[%s154 + $0x78] sm:$0xff]
        %v199 = vld [vmem:[#allocation5] sm:$0xff]
        %v200 = vld [vmem:[#allocation5 + $0x8] sm:$0xff]
        %v201 = vld [vmem:[#allocation5 + $0x10] sm:$0xff]
        %v202 = vld [vmem:[#allocation5 + $0x18] sm:$0xff]
        %v203 = vld [vmem:[#allocation5 + $0x20] sm:$0xff]
        %v204 = vld [vmem:[#allocation5 + $0x28] sm:$0xff]
        %v205 = vld [vmem:[#allocation5 + $0x30] sm:$0xff]
        %v206 = vld [vmem:[#allocation5 + $0x38] sm:$0xff]
        %v207 = vld [vmem:[#allocation5 + $0x40] sm:$0xff]
        %v208 = vld [vmem:[#allocation5 + $0x48] sm:$0xff]
        %v209 = vld [vmem:[#allocation5 + $0x50] sm:$0xff]
        %v210 = vld [vmem:[#allocation5 + $0x58] sm:$0xff]
        %v211 = vld [vmem:[#allocation5 + $0x60] sm:$0xff]
        %v212 = vld [vmem:[#allocation5 + $0x68] sm:$0xff]
        %v213 = vld [vmem:[#allocation5 + $0x70] sm:$0xff]
        %v214 = vld [vmem:[#allocation5 + $0x78] sm:$0xff]
        %215 = vmatpush.msra.mxu0 %v214
        %216 = vmatpush.msra.mxu0 %v213
        %217 = vmatpush.msra.mxu0 %v212
        %218 = vmatpush.msra.mxu0 %v211
        %219 = vmatpush.msra.mxu0 %v210
        %220 = vmatpush.msra.mxu0 %v209
        %221 = vmatpush.msra.mxu0 %v208
        %222 = vmatpush.msra.mxu0 %v207
        %223 = vmatpush.msra.mxu0 %v206
        %224 = vmatpush.msra.mxu0 %v205
        %225 = vmatpush.msra.mxu0 %v204
        %226 = vmatpush.msra.mxu0 %v203
        %227 = vmatpush.msra.mxu0 %v202
        %228 = vmatpush.msra.mxu0 %v201
        %229 = vmatpush.msra.mxu0 %v200
        %230 = vmatpush.msra.mxu0 %v199
        %231 = vmatmul.f32.gmra.mxu0 %v183
        %v232 = vpop.f32.mrf.mxu0
        %v233 = vadd.f32 0.0, %v232
        %234 = vmatmul.f32.gmra.mxu0 %v184
        %v235 = vpop.f32.mrf.mxu0
        %v236 = vadd.f32 0.0, %v235
        %237 = vmatmul.f32.gmra.mxu0 %v185
        %v238 = vpop.f32.mrf.mxu0
        %v239 = vadd.f32 0.0, %v238
        %240 = vmatmul.f32.gmra.mxu0 %v186
        %v241 = vpop.f32.mrf.mxu0
        %v242 = vadd.f32 0.0, %v241
        %243 = vmatmul.f32.gmra.mxu0 %v187
        %v244 = vpop.f32.mrf.mxu0
        %v245 = vadd.f32 0.0, %v244
        %246 = vmatmul.f32.gmra.mxu0 %v188
        %v247 = vpop.f32.mrf.mxu0
        %v248 = vadd.f32 0.0, %v247
        %249 = vmatmul.f32.gmra.mxu0 %v189
        %v250 = vpop.f32.mrf.mxu0
        %v251 = vadd.f32 0.0, %v250
        %252 = vmatmul.f32.gmra.mxu0 %v190
        %v253 = vpop.f32.mrf.mxu0
        %v254 = vadd.f32 0.0, %v253
        %255 = vmatmul.f32.gmra.mxu0 %v191
        %v256 = vpop.f32.mrf.mxu0
        %v257 = vadd.f32 0.0, %v256
        %258 = vmatmul.f32.gmra.mxu0 %v192
        %v259 = vpop.f32.mrf.mxu0
        %v260 = vadd.f32 0.0, %v259
        %261 = vmatmul.f32.gmra.mxu0 %v193
        %v262 = vpop.f32.mrf.mxu0
        %v263 = vadd.f32 0.0, %v262
        %264 = vmatmul.f32.gmra.mxu0 %v194
        %v265 = vpop.f32.mrf.mxu0
        %v266 = vadd.f32 0.0, %v265
        %267 = vmatmul.f32.gmra.mxu0 %v195
        %v268 = vpop.f32.mrf.mxu0
        %v269 = vadd.f32 0.0, %v268
        %270 = vmatmul.f32.gmra.mxu0 %v196
        %v271 = vpop.f32.mrf.mxu0
        %v272 = vadd.f32 0.0, %v271
        %273 = vmatmul.f32.gmra.mxu0 %v197
        %v274 = vpop.f32.mrf.mxu0
        %v275 = vadd.f32 0.0, %v274
        %276 = vmatmul.f32.gmra.mxu0 %v198
        %v277 = vpop.f32.mrf.mxu0
        %v278 = vadd.f32 0.0, %v277
        %279 = vdwg.mxu0
        %v280 = vpack.c.bf16 %v233, %v233
        %v281 = vpack.c.bf16 %v236, %v236
        %v282 = vpack.c.bf16 %v239, %v239
        %v283 = vpack.c.bf16 %v242, %v242
        %v284 = vpack.c.bf16 %v245, %v245
        %v285 = vpack.c.bf16 %v248, %v248
        %v286 = vpack.c.bf16 %v251, %v251
        %v287 = vpack.c.bf16 %v254, %v254
        %v288 = vpack.c.bf16 %v257, %v257
        %v289 = vpack.c.bf16 %v260, %v260
        %v290 = vpack.c.bf16 %v263, %v263
        %v291 = vpack.c.bf16 %v266, %v266
        %v292 = vpack.c.bf16 %v269, %v269
        %v293 = vpack.c.bf16 %v272, %v272
        %v294 = vpack.c.bf16 %v275, %v275
        %v295 = vpack.c.bf16 %v278, %v278
        %296 = vst [vmem:[%s180] sm:$0xf] %v280
        %297 = vst [vmem:[%s180 + $0x4] sm:$0xf] %v281
        %298 = vst [vmem:[%s180 + $0x8] sm:$0xf] %v282
        %299 = vst [vmem:[%s180 + $0xc] sm:$0xf] %v283
        %300 = vst [vmem:[%s180 + $0x10] sm:$0xf] %v284
        %301 = vst [vmem:[%s180 + $0x14] sm:$0xf] %v285
        %302 = vst [vmem:[%s180 + $0x18] sm:$0xf] %v286
        %303 = vst [vmem:[%s180 + $0x1c] sm:$0xf] %v287
        %304 = vst [vmem:[%s180 + $0x20] sm:$0xf] %v288
        %305 = vst [vmem:[%s180 + $0x24] sm:$0xf] %v289
        %306 = vst [vmem:[%s180 + $0x28] sm:$0xf] %v290
        %307 = vst [vmem:[%s180 + $0x2c] sm:$0xf] %v291
        %308 = vst [vmem:[%s180 + $0x30] sm:$0xf] %v292
        %309 = vst [vmem:[%s180 + $0x34] sm:$0xf] %v293
        %310 = vst [vmem:[%s180 + $0x38] sm:$0xf] %v294
        %311 = vst [vmem:[%s180 + $0x3c] sm:$0xf] %v295
        %s312 = sand.u32 %s75, 1
        %s313 = scalar_lea.sflag [#allocation4], %s312
        %s314 = sand.u32 %s75, 1
        %s315 = smul.addr %s314, 64
        %s316 = scalar_lea.vmem [#allocation7], %s315
        // Predicated region
        $region37: #{tpu_custom_call.1} parent=27 // pred_check
          %p317 = pneg %p85
        $region38: #{tpu_custom_call.1} parent=27 // pred_check_branch
          %319 = sbr.rel (%p317) target = $region40
        $region39: #{tpu_custom_call.1} parent=27 // pred_region
          %s320 = smul.u32 16, %s20
          %322 = vsyncadd %s313, 0
          %s323 = smul.addr %s320, 4
          %s324 = scalar_lea.hbm %s2, %s323
          %s325 = sshll.u32 %s316, 4
          %s326 = int_to_ptr.vmem [resolvable:$true] %s325
          %s327 = sshll.u32 %s324, 4
          %s328 = int_to_ptr.hbm [resolvable:$true] %s327
          %333 = dma.vmem_to_hbm [thread:$0]  %s326, 1024, %s328, %s313, 64, 64, 4
        $region40: #{tpu_custom_call.1} parent=27 // pred_fallthru
          _
      $region28: #{tpu_custom_call.1} parent=5 // pred_fallthru
        _
      %p334 = scmp.le.s32.totalorder 2, %s15
      // Predicated region
      $region41: #{tpu_custom_call.1} parent=5 // pred_check
        %p335 = pneg %p334
      $region42: #{tpu_custom_call.1} parent=5 // pred_check_branch
        %337 = sbr.rel (%p335) target = $region44
      $region43: #{tpu_custom_call.1} parent=5 // pred_region
        %s338 = ssub.s32 %s15, 2
        // Predicated region
        $region45: #{tpu_custom_call.1} parent=43 // pred_check
          %p339 = pneg %p91
        $region46: #{tpu_custom_call.1} parent=43 // pred_check_branch
          %341 = sbr.rel (%p339) target = $region48
        $region47: #{tpu_custom_call.1} parent=43 // pred_region
          %s342 = sand.u32 %s76, 1
          %s343 = scalar_lea.sflag [#allocation4], %s342
          %s344 = sand.u32 %s76, 1
          %s345 = smul.addr %s344, 64
          %s346 = scalar_lea.vmem [#allocation7], %s345
          %348 = dma.done %s343, 1024
        $region48: #{tpu_custom_call.1} parent=43 // pred_fallthru
          _
      $region44: #{tpu_custom_call.1} parent=5 // pred_fallthru
        _
    $region6: #{tpu_custom_call.1} parent=1 // loop_footer
      %s19 = sadd.s32 1, %s15
    $region7: #{tpu_custom_call.1} parent=1 // loop_footer_branch
      %14 = sbr.rel target = $region3
    $region8: #{tpu_custom_call.1} parent=1 // loop_exit
      _
    %349 = vsyncpa [#allocation3], 1
    %s350 = scalar_lea.sflag [#allocation3], 1
    %351 = vsyncpa %s350, 1
    %352 = vsyncpa [#allocation6], 1
    %353 = vsyncpa [#allocation4], 1
    %s354 = scalar_lea.sflag [#allocation4], 1
    %355 = vsyncpa %s354, 1

</llo_original>
